<compile_context>
chip_gen: v6e
topology: v6e:2x2x1
jax: 0.10.0
libtpu: 0.0.40
codegen_flags: <defaults>
</compile_context>

<pallas_src>
import jax
import jax.numpy as jnp
import numpy as np
from jax.experimental import pallas as pl
from jax.experimental.pallas import tpu as pltpu


# ----------------------------------------------------------------------------
# Fused Pallas kernel: whole network, single grid step, batch folded into rows
# ----------------------------------------------------------------------------
def _make_fused_tcn_kernel(layer_meta, B, L, K):
    """Ref order:
      x_ref (B*L, Cin0) f32
      per layer: w1 (K, cin, ce) bf16, b1 (1, ce) f32,      # ce = 2*cout if fused residual
                 w2 (K, cout, cout) bf16, b2 (1, cout) f32
      wl (C_last, OPAD) bf16, bl (1, OPAD) f32
      o_ref (B, OPAD) f32
    """

    def kernel(*refs):
        it = iter(refs)
        x_ref = next(it)
        layer_refs = [(next(it), next(it), next(it), next(it)) for _ in layer_meta]
        wl_ref = next(it)
        bl_ref = next(it)
        o_ref = next(it)

        N = B * L
        # time-within-batch index for every flattened row (masks causal shifts so
        # rolled rows never leak across batch boundaries)
        t_idx = jax.lax.broadcasted_iota(jnp.int32, (N, 1), 0) % L

        def shifted_tap(h, s):
            # shifted[t] = h[t - s] within each batch element, 0 for t < s
            if s == 0:
                return h
            rolled = pltpu.roll(h, shift=s, axis=0)
            return jnp.where(t_idx >= s, rolled, 0.0)

        h = x_ref[...]                                          # (N, Cin0) f32
        for meta, (w1, b1, w2, b2) in zip(layer_meta, layer_refs):
            cout, d, has_down = meta["cout"], meta["d"], meta["has_down"]

            # dilated causal conv1 (+ fused 1x1 residual columns when has_down):
            # K accumulated MXU dots, f32 accumulation, bias/ReLU in f32.
            acc = b1[...]
            for k in range(K):
                tap = shifted_tap(h, (K - 1 - k) * d)
                acc = acc + jnp.dot(tap.astype(jnp.bfloat16), w1[k],
                                    preferred_element_type=jnp.float32)
            if has_down:
                h1 = jnp.maximum(acc[:, :cout], 0.0)
                res = acc[:, cout:]                             # 1x1 downsample(h)
            else:
                h1 = jnp.maximum(acc, 0.0)
                res = h
            # dropout == identity at eval

            # dilated causal conv2
            acc2 = b2[...]
            for k in range(K):
                tap = shifted_tap(h1, (K - 1 - k) * d)
                acc2 = acc2 + jnp.dot(tap.astype(jnp.bfloat16), w2[k],
                                      preferred_element_type=jnp.float32)
            h2 = jnp.maximum(acc2, 0.0)

            h = jnp.maximum(h2 + res, 0.0)                      # (N, cout)

        # head: Linear on the last time step of each batch element + log_softmax.
        xlast = h.reshape(B, L, h.shape[-1])[:, L - 1, :]       # (B, C_last)
        logits = jnp.dot(xlast.astype(jnp.bfloat16), wl_ref[...],
                         preferred_element_type=jnp.float32) + bl_ref[...]
        m = jnp.max(logits, axis=1, keepdims=True)
        s = logits - m
        lse = jnp.log(jnp.sum(jnp.exp(s), axis=1, keepdims=True))
        o_ref[...] = s - lse

    return kernel


# ----------------------------------------------------------------------------
# Wrapper: param reshaping/casting/fusion, specs, single pallas_call
# ----------------------------------------------------------------------------
def tcn_forward(x_ncw, block_params, head_params, kernel_size):
    """Full fused TCN forward. x_ncw: (B, input_size, L), like the PyTorch NCW input."""
    B, cin0, L = x_ncw.shape
    K = kernel_size
    # time-major, batch folded into the row axis
    x = jnp.transpose(x_ncw, (0, 2, 1)).astype(jnp.float32).reshape(B * L, cin0)

    layer_meta = []
    inputs = [x]
    in_specs = [pl.BlockSpec((B * L, cin0), lambda i: (0, 0))]

    cin = cin0
    for idx, (w1, b1, w2, b2, wd, bd) in enumerate(block_params):
        cout = w1.shape[2]
        d = 2 ** idx
        has_down = wd is not None
        layer_meta.append(dict(cout=cout, d=d, has_down=has_down))

        if has_down:
            # Fuse the 1x1 residual downsample into conv1's last tap: extra cout
            # columns hold wd in tap K-1 (the unshifted input) and zeros elsewhere.
            taps = []
            for k in range(K):
                extra = wd if k == K - 1 else jnp.zeros((cin, cout), jnp.float32)
                taps.append(jnp.concatenate([w1[k], extra], axis=1)[None])
            w1f = jnp.concatenate(taps, axis=0)                 # (K, cin, 2*cout)
            b1f = jnp.concatenate([b1, bd], axis=1)             # (1, 2*cout)
            ce = 2 * cout
        else:
            w1f, b1f, ce = w1, b1, cout

        inputs += [w1f.astype(jnp.bfloat16), b1f.astype(jnp.float32),
                   w2.astype(jnp.bfloat16), b2.astype(jnp.float32)]
        in_specs += [pl.BlockSpec((K, cin, ce), lambda i: (0, 0, 0)),
                     pl.BlockSpec((1, ce), lambda i: (0, 0)),
                     pl.BlockSpec((K, cout, cout), lambda i: (0, 0, 0)),
                     pl.BlockSpec((1, cout), lambda i: (0, 0))]
        cin = cout

    # head: pad class dim to a multiple of 128 for a lane-dense output store.
    # Padded columns get a -1e9 bias so they never win the max / contribute to lse.
    wl, bl = head_params
    out_size = wl.shape[1]
    opad = ((out_size + 127) // 128) * 128
    wl_p = jnp.zeros((cin, opad), jnp.float32).at[:, :out_size].set(wl)
    wl_p = wl_p.astype(jnp.bfloat16)
    bl_p = jnp.full((1, opad), -1e9, jnp.float32).at[:, :out_size].set(bl)
    inputs += [wl_p, bl_p]
    in_specs += [pl.BlockSpec((cin, opad), lambda i: (0, 0)),
                 pl.BlockSpec((1, opad), lambda i: (0, 0))]

    kernel = _make_fused_tcn_kernel(layer_meta, B, L, K)

    out_padded = pl.pallas_call(
        kernel,
        out_shape=jax.ShapeDtypeStruct((B, opad), jnp.float32),
        grid=(1,),
        in_specs=in_specs,
        out_specs=pl.BlockSpec((B, opad), lambda i: (0, 0)),
        compiler_params=pltpu.CompilerParams(
            dimension_semantics=("arbitrary",)),
    )(*inputs)

    return out_padded[:, :out_size]


# ----------------------------------------------------------------------------
# Deterministic parameter init (synthetic; mirrors normal_(0, 0.01) weight init)
# ----------------------------------------------------------------------------
def init_params(key, input_size, output_size, num_channels, kernel_size):
    block_params = []
    cin = input_size
    for cout in num_channels:
        key, k1, k2, k3, k4, k5, k6 = jax.random.split(key, 7)
        w1 = 0.01 * jax.random.normal(k1, (kernel_size, cin, cout), jnp.float32)
        b1 = 0.01 * jax.random.normal(k2, (1, cout), jnp.float32)
        w2 = 0.01 * jax.random.normal(k3, (kernel_size, cout, cout), jnp.float32)
        b2 = 0.01 * jax.random.normal(k4, (1, cout), jnp.float32)
        if cin != cout:
            wd = 0.01 * jax.random.normal(k5, (cin, cout), jnp.float32)
            bd = 0.01 * jax.random.normal(k6, (1, cout), jnp.float32)
        else:
            wd, bd = None, None
        block_params.append((w1, b1, w2, b2, wd, bd))
        cin = cout
    key, kl1, kl2 = jax.random.split(key, 3)
    wl = 0.01 * jax.random.normal(kl1, (cin, output_size), jnp.float32)
    bl = 0.01 * jax.random.normal(kl2, (1, output_size), jnp.float32)
    return block_params, (wl, bl)


# ----------------------------------------------------------------------------
# Pure-JAX reference (f32, no Pallas) for a sanity check
# ----------------------------------------------------------------------------
def _ref_block(x, params, d, K):
    w1, b1, w2, b2, wd, bd = params
    pad = (K - 1) * d
    L = x.shape[1]
    xp = jnp.pad(x, ((0, 0), (pad, 0), (0, 0)))
    h = sum(jnp.einsum("blc,cd->bld", xp[:, k * d:k * d + L, :], w1[k])
            for k in range(K)) + b1
    h = jnp.maximum(h, 0.0)
    hp = jnp.pad(h, ((0, 0), (pad, 0), (0, 0)))
    h2 = sum(jnp.einsum("blc,cd->bld", hp[:, k * d:k * d + L, :], w2[k])
             for k in range(K)) + b2
    h2 = jnp.maximum(h2, 0.0)
    res = x if wd is None else jnp.einsum("blc,cd->bld", x, wd) + bd
    return jnp.maximum(h2 + res, 0.0)


def _ref_forward(x_ncw, block_params, head_params, kernel_size):
    x = jnp.transpose(x_ncw, (0, 2, 1)).astype(jnp.float32)
    for i, p in enumerate(block_params):
        x = _ref_block(x, p, 2 ** i, kernel_size)
    wl, bl = head_params
    logits = x[:, -1, :] @ wl + bl
    return jax.nn.log_softmax(logits, axis=1)


# ----------------------------------------------------------------------------
if __name__ == "__main__":
    # Module config: TCN(input_size=4, output_size=10, num_channels=[32, 32],
    #                    kernel_size=2, dropout=0.0)  -- dropout inert at eval.
    input_size = 4
    output_size = 10
    num_channels = [32, 32]
    kernel_size = 2
    B, L = 2, 16

    key = jax.random.PRNGKey(0)
    key, kx = jax.random.split(key)
    x = jax.random.normal(kx, (B, input_size, L), jnp.float32)  # NCW like PyTorch

    block_params, head_params = init_params(
        key, input_size, output_size, num_channels, kernel_size)

    out = tcn_forward(x, block_params, head_params, kernel_size)
    out = jax.block_until_ready(out)

    # sanity checks vs pure-JAX f32 reference and log_softmax normalization
    ref = _ref_forward(x, block_params, head_params, kernel_size)
    np.testing.assert_allclose(np.asarray(out), np.asarray(ref),
                               rtol=1e-3, atol=1e-3)
    np.testing.assert_allclose(np.exp(np.asarray(out)).sum(axis=1),
                               np.ones(B), rtol=1e-4, atol=1e-4)
    assert out.shape == (B, output_size)

    print("KERNEL_OK")
</pallas_src>

<mosaic_0001>
module attributes {stable_mosaic.version = 11 : i64} {
  func.func @kernel(%arg0: i32, %arg1: memref<32x4xf32, #tpu.memory_space<vmem>>, %arg2: memref<2x4x64xbf16, #tpu.memory_space<vmem>>, %arg3: memref<1x64xf32, #tpu.memory_space<vmem>>, %arg4: memref<2x32x32xbf16, #tpu.memory_space<vmem>>, %arg5: memref<1x32xf32, #tpu.memory_space<vmem>>, %arg6: memref<2x32x32xbf16, #tpu.memory_space<vmem>>, %arg7: memref<1x32xf32, #tpu.memory_space<vmem>>, %arg8: memref<2x32x32xbf16, #tpu.memory_space<vmem>>, %arg9: memref<1x32xf32, #tpu.memory_space<vmem>>, %arg10: memref<32x128xbf16, #tpu.memory_space<vmem>>, %arg11: memref<1x128xf32, #tpu.memory_space<vmem>>, %arg12: memref<2x128xf32, #tpu.memory_space<vmem>>) attributes {dimension_semantics = [#tpu.dimension_semantics<arbitrary>], iteration_bounds = array<i64: 1>, scalar_prefetch = 0 : i64, scratch_operands = 0 : i64, tpu.core_type = #tpu.core_type<tc>, window_params = [{pipeline_mode = #tpu.pipeline_mode<synchronous>, transform_indices = @transform_0, window_bounds = array<i64: 32, 4>}, {pipeline_mode = #tpu.pipeline_mode<synchronous>, transform_indices = @transform_1, window_bounds = array<i64: 2, 4, 64>}, {pipeline_mode = #tpu.pipeline_mode<synchronous>, transform_indices = @transform_2, window_bounds = array<i64: 1, 64>}, {pipeline_mode = #tpu.pipeline_mode<synchronous>, transform_indices = @transform_3, window_bounds = array<i64: 2, 32, 32>}, {pipeline_mode = #tpu.pipeline_mode<synchronous>, transform_indices = @transform_4, window_bounds = array<i64: 1, 32>}, {pipeline_mode = #tpu.pipeline_mode<synchronous>, transform_indices = @transform_5, window_bounds = array<i64: 2, 32, 32>}, {pipeline_mode = #tpu.pipeline_mode<synchronous>, transform_indices = @transform_6, window_bounds = array<i64: 1, 32>}, {pipeline_mode = #tpu.pipeline_mode<synchronous>, transform_indices = @transform_7, window_bounds = array<i64: 2, 32, 32>}, {pipeline_mode = #tpu.pipeline_mode<synchronous>, transform_indices = @transform_8, window_bounds = array<i64: 1, 32>}, {pipeline_mode = #tpu.pipeline_mode<synchronous>, transform_indices = @transform_9, window_bounds = array<i64: 32, 128>}, {pipeline_mode = #tpu.pipeline_mode<synchronous>, transform_indices = @transform_10, window_bounds = array<i64: 1, 128>}, {pipeline_mode = #tpu.pipeline_mode<synchronous>, transform_indices = @transform_11, window_bounds = array<i64: 2, 128>}]} {
    %0 = tpu.iota {dimensions = array<i32: 0>} : vector<32x1xi32>
    %c16_i32 = arith.constant 16 : i32
    %c0_i32 = arith.constant 0 : i32
    %1 = arith.cmpi eq, %c16_i32, %c0_i32 : i32
    %c1_i32 = arith.constant 1 : i32
    %2 = arith.select %1, %c1_i32, %c16_i32 : i32
    %3 = vector.broadcast %2 : i32 to vector<32x1xi32>
    %4 = arith.remsi %0, %3 : vector<32x1xi32>
    %c0_i32_0 = arith.constant 0 : i32
    %5 = vector.broadcast %c0_i32_0 : i32 to vector<32x1xi32>
    %6 = arith.cmpi ne, %4, %5 : vector<32x1xi32>
    %c0_i32_1 = arith.constant 0 : i32
    %7 = vector.broadcast %c0_i32_1 : i32 to vector<32x1xi32>
    %8 = arith.cmpi slt, %4, %7 : vector<32x1xi32>
    %c0_i32_2 = arith.constant 0 : i32
    %9 = arith.cmpi slt, %2, %c0_i32_2 : i32
    %10 = vector.broadcast %9 : i1 to vector<32x1xi1>
    %11 = vector.broadcast %10 : vector<32x1xi1> to vector<32x1xi1>
    %12 = arith.xori %8, %11 : vector<32x1xi1>
    %13 = arith.andi %12, %6 : vector<32x1xi1>
    %14 = vector.broadcast %2 : i32 to vector<32x1xi32>
    %15 = arith.addi %4, %14 : vector<32x1xi32>
    %16 = arith.select %13, %15, %4 : vector<32x1xi1>, vector<32x1xi32>
    %c0 = arith.constant 0 : index
    %c0_3 = arith.constant 0 : index
    %17 = vector.load %arg1[%c0, %c0_3] : memref<32x4xf32, #tpu.memory_space<vmem>>, vector<32x4xf32>
    %c0_4 = arith.constant 0 : index
    %c0_5 = arith.constant 0 : index
    %18 = vector.load %arg3[%c0_4, %c0_5] : memref<1x64xf32, #tpu.memory_space<vmem>>, vector<1x64xf32>
    %c1_i32_6 = arith.constant 1 : i32
    %19 = tpu.dynamic_rotate %17 by %c1_i32_6 dim 0 : vector<32x4xf32>, i32 -> vector<32x4xf32>
    %c1_i32_7 = arith.constant 1 : i32
    %20 = vector.broadcast %c1_i32_7 : i32 to vector<32x1xi32>
    %21 = arith.cmpi sge, %16, %20 : vector<32x1xi32>
    %cst = arith.constant 0.000000e+00 : f32
    %22 = vector.shape_cast %21 : vector<32x1xi1> to vector<32x1xi1>
    %23 = vector.broadcast %22 : vector<32x1xi1> to vector<32x4xi1>
    %24 = vector.broadcast %cst : f32 to vector<32x4xf32>
    %25 = arith.select %23, %19, %24 : vector<32x4xi1>, vector<32x4xf32>
    %26 = arith.truncf %25 : vector<32x4xf32> to vector<32x4xbf16>
    %c0_8 = arith.constant 0 : index
    %c0_9 = arith.constant 0 : index
    %c0_10 = arith.constant 0 : index
    %27 = vector.load %arg2[%c0_8, %c0_9, %c0_10] : memref<2x4x64xbf16, #tpu.memory_space<vmem>>, vector<1x4x64xbf16>
    %28 = vector.shape_cast %27 : vector<1x4x64xbf16> to vector<4x64xbf16>
    %cst_11 = arith.constant dense<0.000000e+00> : vector<32x64xf32>
    %29 = tpu.matmul %26, %28, %cst_11 {dimension_numbers = #tpu.dot_dimension_numbers<[1], [0], [0], [1], [0, 0, 1, 1], [], []>} : vector<32x4xbf16>, vector<4x64xbf16>, vector<32x64xf32> -> vector<32x64xf32>
    %30 = vector.broadcast %18 : vector<1x64xf32> to vector<32x64xf32>
    %31 = arith.addf %30, %29 : vector<32x64xf32>
    %32 = arith.truncf %17 : vector<32x4xf32> to vector<32x4xbf16>
    %c1 = arith.constant 1 : index
    %c0_12 = arith.constant 0 : index
    %c0_13 = arith.constant 0 : index
    %33 = vector.load %arg2[%c1, %c0_12, %c0_13] : memref<2x4x64xbf16, #tpu.memory_space<vmem>>, vector<1x4x64xbf16>
    %34 = vector.shape_cast %33 : vector<1x4x64xbf16> to vector<4x64xbf16>
    %cst_14 = arith.constant dense<0.000000e+00> : vector<32x64xf32>
    %35 = tpu.matmul %32, %34, %cst_14 {dimension_numbers = #tpu.dot_dimension_numbers<[1], [0], [0], [1], [0, 0, 1, 1], [], []>} : vector<32x4xbf16>, vector<4x64xbf16>, vector<32x64xf32> -> vector<32x64xf32>
    %36 = arith.addf %31, %35 : vector<32x64xf32>
    %37 = vector.extract_strided_slice %36 {offsets = [0, 0], sizes = [32, 32], strides = [1, 1]} : vector<32x64xf32> to vector<32x32xf32>
    %cst_15 = arith.constant 0.000000e+00 : f32
    %38 = vector.broadcast %cst_15 : f32 to vector<32x32xf32>
    %39 = arith.maximumf %37, %38 : vector<32x32xf32>
    %40 = vector.extract_strided_slice %36 {offsets = [0, 32], sizes = [32, 32], strides = [1, 1]} : vector<32x64xf32> to vector<32x32xf32>
    %c0_16 = arith.constant 0 : index
    %c0_17 = arith.constant 0 : index
    %41 = vector.load %arg5[%c0_16, %c0_17] : memref<1x32xf32, #tpu.memory_space<vmem>>, vector<1x32xf32>
    %c1_i32_18 = arith.constant 1 : i32
    %42 = tpu.dynamic_rotate %39 by %c1_i32_18 dim 0 : vector<32x32xf32>, i32 -> vector<32x32xf32>
    %c1_i32_19 = arith.constant 1 : i32
    %43 = vector.broadcast %c1_i32_19 : i32 to vector<32x1xi32>
    %44 = arith.cmpi sge, %16, %43 : vector<32x1xi32>
    %cst_20 = arith.constant 0.000000e+00 : f32
    %45 = vector.shape_cast %44 : vector<32x1xi1> to vector<32x1xi1>
    %46 = vector.broadcast %45 : vector<32x1xi1> to vector<32x32xi1>
    %47 = vector.broadcast %cst_20 : f32 to vector<32x32xf32>
    %48 = arith.select %46, %42, %47 : vector<32x32xi1>, vector<32x32xf32>
    %49 = arith.truncf %48 : vector<32x32xf32> to vector<32x32xbf16>
    %c0_21 = arith.constant 0 : index
    %c0_22 = arith.constant 0 : index
    %c0_23 = arith.constant 0 : index
    %50 = vector.load %arg4[%c0_21, %c0_22, %c0_23] : memref<2x32x32xbf16, #tpu.memory_space<vmem>>, vector<1x32x32xbf16>
    %51 = vector.shape_cast %50 : vector<1x32x32xbf16> to vector<32x32xbf16>
    %cst_24 = arith.constant dense<0.000000e+00> : vector<32x32xf32>
    %52 = tpu.matmul %49, %51, %cst_24 {dimension_numbers = #tpu.dot_dimension_numbers<[1], [0], [0], [1], [0, 0, 1, 1], [], []>} : vector<32x32xbf16>, vector<32x32xbf16>, vector<32x32xf32> -> vector<32x32xf32>
    %53 = vector.broadcast %41 : vector<1x32xf32> to vector<32x32xf32>
    %54 = arith.addf %53, %52 : vector<32x32xf32>
    %55 = arith.truncf %39 : vector<32x32xf32> to vector<32x32xbf16>
    %c1_25 = arith.constant 1 : index
    %c0_26 = arith.constant 0 : index
    %c0_27 = arith.constant 0 : index
    %56 = vector.load %arg4[%c1_25, %c0_26, %c0_27] : memref<2x32x32xbf16, #tpu.memory_space<vmem>>, vector<1x32x32xbf16>
    %57 = vector.shape_cast %56 : vector<1x32x32xbf16> to vector<32x32xbf16>
    %cst_28 = arith.constant dense<0.000000e+00> : vector<32x32xf32>
    %58 = tpu.matmul %55, %57, %cst_28 {dimension_numbers = #tpu.dot_dimension_numbers<[1], [0], [0], [1], [0, 0, 1, 1], [], []>} : vector<32x32xbf16>, vector<32x32xbf16>, vector<32x32xf32> -> vector<32x32xf32>
    %59 = arith.addf %54, %58 : vector<32x32xf32>
    %cst_29 = arith.constant 0.000000e+00 : f32
    %60 = vector.broadcast %cst_29 : f32 to vector<32x32xf32>
    %61 = arith.maximumf %59, %60 : vector<32x32xf32>
    %62 = arith.addf %61, %40 : vector<32x32xf32>
    %cst_30 = arith.constant 0.000000e+00 : f32
    %63 = vector.broadcast %cst_30 : f32 to vector<32x32xf32>
    %64 = arith.maximumf %62, %63 : vector<32x32xf32>
    %c0_31 = arith.constant 0 : index
    %c0_32 = arith.constant 0 : index
    %65 = vector.load %arg7[%c0_31, %c0_32] : memref<1x32xf32, #tpu.memory_space<vmem>>, vector<1x32xf32>
    %c2_i32 = arith.constant 2 : i32
    %66 = tpu.dynamic_rotate %64 by %c2_i32 dim 0 : vector<32x32xf32>, i32 -> vector<32x32xf32>
    %c2_i32_33 = arith.constant 2 : i32
    %67 = vector.broadcast %c2_i32_33 : i32 to vector<32x1xi32>
    %68 = arith.cmpi sge, %16, %67 : vector<32x1xi32>
    %cst_34 = arith.constant 0.000000e+00 : f32
    %69 = vector.shape_cast %68 : vector<32x1xi1> to vector<32x1xi1>
    %70 = vector.broadcast %69 : vector<32x1xi1> to vector<32x32xi1>
    %71 = vector.broadcast %cst_34 : f32 to vector<32x32xf32>
    %72 = arith.select %70, %66, %71 : vector<32x32xi1>, vector<32x32xf32>
    %73 = arith.truncf %72 : vector<32x32xf32> to vector<32x32xbf16>
    %c0_35 = arith.constant 0 : index
    %c0_36 = arith.constant 0 : index
    %c0_37 = arith.constant 0 : index
    %74 = vector.load %arg6[%c0_35, %c0_36, %c0_37] : memref<2x32x32xbf16, #tpu.memory_space<vmem>>, vector<1x32x32xbf16>
    %75 = vector.shape_cast %74 : vector<1x32x32xbf16> to vector<32x32xbf16>
    %cst_38 = arith.constant dense<0.000000e+00> : vector<32x32xf32>
    %76 = tpu.matmul %73, %75, %cst_38 {dimension_numbers = #tpu.dot_dimension_numbers<[1], [0], [0], [1], [0, 0, 1, 1], [], []>} : vector<32x32xbf16>, vector<32x32xbf16>, vector<32x32xf32> -> vector<32x32xf32>
    %77 = vector.broadcast %65 : vector<1x32xf32> to vector<32x32xf32>
    %78 = arith.addf %77, %76 : vector<32x32xf32>
    %79 = arith.truncf %64 : vector<32x32xf32> to vector<32x32xbf16>
    %c1_39 = arith.constant 1 : index
    %c0_40 = arith.constant 0 : index
    %c0_41 = arith.constant 0 : index
    %80 = vector.load %arg6[%c1_39, %c0_40, %c0_41] : memref<2x32x32xbf16, #tpu.memory_space<vmem>>, vector<1x32x32xbf16>
    %81 = vector.shape_cast %80 : vector<1x32x32xbf16> to vector<32x32xbf16>
    %cst_42 = arith.constant dense<0.000000e+00> : vector<32x32xf32>
    %82 = tpu.matmul %79, %81, %cst_42 {dimension_numbers = #tpu.dot_dimension_numbers<[1], [0], [0], [1], [0, 0, 1, 1], [], []>} : vector<32x32xbf16>, vector<32x32xbf16>, vector<32x32xf32> -> vector<32x32xf32>
    %83 = arith.addf %78, %82 : vector<32x32xf32>
    %cst_43 = arith.constant 0.000000e+00 : f32
    %84 = vector.broadcast %cst_43 : f32 to vector<32x32xf32>
    %85 = arith.maximumf %83, %84 : vector<32x32xf32>
    %c0_44 = arith.constant 0 : index
    %c0_45 = arith.constant 0 : index
    %86 = vector.load %arg9[%c0_44, %c0_45] : memref<1x32xf32, #tpu.memory_space<vmem>>, vector<1x32xf32>
    %c2_i32_46 = arith.constant 2 : i32
    %87 = tpu.dynamic_rotate %85 by %c2_i32_46 dim 0 : vector<32x32xf32>, i32 -> vector<32x32xf32>
    %c2_i32_47 = arith.constant 2 : i32
    %88 = vector.broadcast %c2_i32_47 : i32 to vector<32x1xi32>
    %89 = arith.cmpi sge, %16, %88 : vector<32x1xi32>
    %cst_48 = arith.constant 0.000000e+00 : f32
    %90 = vector.shape_cast %89 : vector<32x1xi1> to vector<32x1xi1>
    %91 = vector.broadcast %90 : vector<32x1xi1> to vector<32x32xi1>
    %92 = vector.broadcast %cst_48 : f32 to vector<32x32xf32>
    %93 = arith.select %91, %87, %92 : vector<32x32xi1>, vector<32x32xf32>
    %94 = arith.truncf %93 : vector<32x32xf32> to vector<32x32xbf16>
    %c0_49 = arith.constant 0 : index
    %c0_50 = arith.constant 0 : index
    %c0_51 = arith.constant 0 : index
    %95 = vector.load %arg8[%c0_49, %c0_50, %c0_51] : memref<2x32x32xbf16, #tpu.memory_space<vmem>>, vector<1x32x32xbf16>
    %96 = vector.shape_cast %95 : vector<1x32x32xbf16> to vector<32x32xbf16>
    %cst_52 = arith.constant dense<0.000000e+00> : vector<32x32xf32>
    %97 = tpu.matmul %94, %96, %cst_52 {dimension_numbers = #tpu.dot_dimension_numbers<[1], [0], [0], [1], [0, 0, 1, 1], [], []>} : vector<32x32xbf16>, vector<32x32xbf16>, vector<32x32xf32> -> vector<32x32xf32>
    %98 = vector.broadcast %86 : vector<1x32xf32> to vector<32x32xf32>
    %99 = arith.addf %98, %97 : vector<32x32xf32>
    %100 = arith.truncf %85 : vector<32x32xf32> to vector<32x32xbf16>
    %c1_53 = arith.constant 1 : index
    %c0_54 = arith.constant 0 : index
    %c0_55 = arith.constant 0 : index
    %101 = vector.load %arg8[%c1_53, %c0_54, %c0_55] : memref<2x32x32xbf16, #tpu.memory_space<vmem>>, vector<1x32x32xbf16>
    %102 = vector.shape_cast %101 : vector<1x32x32xbf16> to vector<32x32xbf16>
    %cst_56 = arith.constant dense<0.000000e+00> : vector<32x32xf32>
    %103 = tpu.matmul %100, %102, %cst_56 {dimension_numbers = #tpu.dot_dimension_numbers<[1], [0], [0], [1], [0, 0, 1, 1], [], []>} : vector<32x32xbf16>, vector<32x32xbf16>, vector<32x32xf32> -> vector<32x32xf32>
    %104 = arith.addf %99, %103 : vector<32x32xf32>
    %cst_57 = arith.constant 0.000000e+00 : f32
    %105 = vector.broadcast %cst_57 : f32 to vector<32x32xf32>
    %106 = arith.maximumf %104, %105 : vector<32x32xf32>
    %107 = arith.addf %106, %64 : vector<32x32xf32>
    %cst_58 = arith.constant 0.000000e+00 : f32
    %108 = vector.broadcast %cst_58 : f32 to vector<32x32xf32>
    %109 = arith.maximumf %107, %108 : vector<32x32xf32>
    %110 = vector.shape_cast %109 : vector<32x32xf32> to vector<2x16x32xf32>
    %111 = vector.extract_strided_slice %110 {offsets = [0, 15, 0], sizes = [2, 1, 32], strides = [1, 1, 1]} : vector<2x16x32xf32> to vector<2x1x32xf32>
    %112 = vector.shape_cast %111 : vector<2x1x32xf32> to vector<2x32xf32>
    %113 = arith.truncf %112 : vector<2x32xf32> to vector<2x32xbf16>
    %c0_59 = arith.constant 0 : index
    %c0_60 = arith.constant 0 : index
    %114 = vector.load %arg10[%c0_59, %c0_60] : memref<32x128xbf16, #tpu.memory_space<vmem>>, vector<32x128xbf16>
    %cst_61 = arith.constant dense<0.000000e+00> : vector<2x128xf32>
    %115 = tpu.matmul %113, %114, %cst_61 {dimension_numbers = #tpu.dot_dimension_numbers<[1], [0], [0], [1], [0, 0, 1, 1], [], []>} : vector<2x32xbf16>, vector<32x128xbf16>, vector<2x128xf32> -> vector<2x128xf32>
    %c0_62 = arith.constant 0 : index
    %c0_63 = arith.constant 0 : index
    %116 = vector.load %arg11[%c0_62, %c0_63] : memref<1x128xf32, #tpu.memory_space<vmem>>, vector<1x128xf32>
    %117 = vector.broadcast %116 : vector<1x128xf32> to vector<2x128xf32>
    %118 = arith.addf %115, %117 : vector<2x128xf32>
    %cst_64 = arith.constant dense<0xFF800000> : vector<2xf32>
    %119 = vector.multi_reduction <maximumf>, %118, %cst_64 [1] : vector<2x128xf32> to vector<2xf32>
    %120 = vector.shape_cast %119 : vector<2xf32> to vector<2x1xf32>
    %121 = vector.broadcast %120 : vector<2x1xf32> to vector<2x128xf32>
    %122 = arith.subf %118, %121 : vector<2x128xf32>
    %123 = math.exp %122 : vector<2x128xf32>
    %cst_65 = arith.constant dense<0.000000e+00> : vector<2xf32>
    %124 = vector.multi_reduction <add>, %123, %cst_65 [1] : vector<2x128xf32> to vector<2xf32>
    %125 = vector.shape_cast %124 : vector<2xf32> to vector<2x1xf32>
    %126 = math.log %125 : vector<2x1xf32>
    %127 = vector.broadcast %126 : vector<2x1xf32> to vector<2x128xf32>
    %128 = arith.subf %122, %127 : vector<2x128xf32>
    %c0_66 = arith.constant 0 : index
    %c0_67 = arith.constant 0 : index
    %129 = vector.load %arg12[%c0_66, %c0_67] : memref<2x128xf32, #tpu.memory_space<vmem>>, vector<2x128xf32>
    tpu.vector_store %arg12[%c0_66, %c0_67], %128 {strides = array<i32>} : memref<2x128xf32, #tpu.memory_space<vmem>>, vector<2x128xf32>,
    return
  }
  func.func @transform_0(%arg0: i32) -> (i32, i32) {
    %c0_i32 = arith.constant 0 : i32
    %c0_i32_0 = arith.constant 0 : i32
    %c0_i32_1 = arith.constant 0 : i32
    return %c0_i32, %c0_i32_0 : i32, i32
  }
  func.func @transform_1(%arg0: i32) -> (i32, i32, i32) {
    %c0_i32 = arith.constant 0 : i32
    %c0_i32_0 = arith.constant 0 : i32
    %c0_i32_1 = arith.constant 0 : i32
    %c0_i32_2 = arith.constant 0 : i32
    return %c0_i32, %c0_i32_0, %c0_i32_1 : i32, i32, i32
  }
  func.func @transform_2(%arg0: i32) -> (i32, i32) {
    %c0_i32 = arith.constant 0 : i32
    %c0_i32_0 = arith.constant 0 : i32
    %c0_i32_1 = arith.constant 0 : i32
    return %c0_i32, %c0_i32_0 : i32, i32
  }
  func.func @transform_3(%arg0: i32) -> (i32, i32, i32) {
    %c0_i32 = arith.constant 0 : i32
    %c0_i32_0 = arith.constant 0 : i32
    %c0_i32_1 = arith.constant 0 : i32
    %c0_i32_2 = arith.constant 0 : i32
    return %c0_i32, %c0_i32_0, %c0_i32_1 : i32, i32, i32
  }
  func.func @transform_4(%arg0: i32) -> (i32, i32) {
    %c0_i32 = arith.constant 0 : i32
    %c0_i32_0 = arith.constant 0 : i32
    %c0_i32_1 = arith.constant 0 : i32
    return %c0_i32, %c0_i32_0 : i32, i32
  }
  func.func @transform_5(%arg0: i32) -> (i32, i32, i32) {
    %c0_i32 = arith.constant 0 : i32
    %c0_i32_0 = arith.constant 0 : i32
    %c0_i32_1 = arith.constant 0 : i32
    %c0_i32_2 = arith.constant 0 : i32
    return %c0_i32, %c0_i32_0, %c0_i32_1 : i32, i32, i32
  }
  func.func @transform_6(%arg0: i32) -> (i32, i32) {
    %c0_i32 = arith.constant 0 : i32
    %c0_i32_0 = arith.constant 0 : i32
    %c0_i32_1 = arith.constant 0 : i32
    return %c0_i32, %c0_i32_0 : i32, i32
  }
  func.func @transform_7(%arg0: i32) -> (i32, i32, i32) {
    %c0_i32 = arith.constant 0 : i32
    %c0_i32_0 = arith.constant 0 : i32
    %c0_i32_1 = arith.constant 0 : i32
    %c0_i32_2 = arith.constant 0 : i32
    return %c0_i32, %c0_i32_0, %c0_i32_1 : i32, i32, i32
  }
  func.func @transform_8(%arg0: i32) -> (i32, i32) {
    %c0_i32 = arith.constant 0 : i32
    %c0_i32_0 = arith.constant 0 : i32
    %c0_i32_1 = arith.constant 0 : i32
    return %c0_i32, %c0_i32_0 : i32, i32
  }
  func.func @transform_9(%arg0: i32) -> (i32, i32) {
    %c0_i32 = arith.constant 0 : i32
    %c0_i32_0 = arith.constant 0 : i32
    %c0_i32_1 = arith.constant 0 : i32
    return %c0_i32, %c0_i32_0 : i32, i32
  }
  func.func @transform_10(%arg0: i32) -> (i32, i32) {
    %c0_i32 = arith.constant 0 : i32
    %c0_i32_0 = arith.constant 0 : i32
    %c0_i32_1 = arith.constant 0 : i32
    return %c0_i32, %c0_i32_0 : i32, i32
  }
  func.func @transform_11(%arg0: i32) -> (i32, i32) {
    %c0_i32 = arith.constant 0 : i32
    %c0_i32_0 = arith.constant 0 : i32
    %c0_i32_1 = arith.constant 0 : i32
    return %c0_i32, %c0_i32_0 : i32, i32
  }
}

</mosaic_0001>

<llo_original>
// kernel: tpu_custom_call.1
$region0: #{tpu_custom_call.1}
  #allocation0 [shape = 'u32[]', space=smem, size = 0x4, offset = 0x4, fixed_abs, tag = 'smem constant byte address 0x4 - core index']
  #allocation1 [shape = 'u32[144,128]{1,0:T(1,128)}', space=vmem, size = 0x12000, scoped, tag = 'internal scratch']
  %s0 = inlined_call_operand.vmem [shape: f32[32,4], index: 0, kind: input, shape index: {}]
  %s1 = inlined_call_operand.hbm [shape: bf16[2,4,64], index: 1, kind: input, shape index: {}]
  %s2 = inlined_call_operand.hbm [shape: f32[1,64], index: 2, kind: input, shape index: {}]
  %s3 = inlined_call_operand.vmem [shape: bf16[2,32,32], index: 3, kind: input, shape index: {}]
  %s4 = inlined_call_operand.hbm [shape: f32[1,32], index: 4, kind: input, shape index: {}]
  %s5 = inlined_call_operand.hbm [shape: bf16[2,32,32], index: 5, kind: input, shape index: {}]
  %s6 = inlined_call_operand.hbm [shape: f32[1,32], index: 6, kind: input, shape index: {}]
  %s7 = inlined_call_operand.hbm [shape: bf16[2,32,32], index: 7, kind: input, shape index: {}]
  %s8 = inlined_call_operand.vmem [shape: f32[1,32], index: 8, kind: input, shape index: {}]
  %s9 = inlined_call_operand.vmem [shape: bf16[32,128], index: 9, kind: input, shape index: {}]
  %s10 = inlined_call_operand.vmem [shape: f32[1,128], index: 10, kind: input, shape index: {}]
  %s11 = inlined_call_operand.hbm [shape: f32[2,128], index: 11, kind: output, shape index: {}]
  %s12 = sld [smem:[#allocation0]]
  $region78: #{tpu_custom_call.1} parent=0
    _
  %s14 = ssub.s32 1, %s12
  %s15 = scalar_select 0, %s14, %s12
  $region1: #{tpu_custom_call.1} parent=0
    #allocation2 [shape = 'u8[2048]{0}', space=vmem, size = 0x800, scoped, tag = 'input window, operand 1, single buffered']
    #allocation3 [shape = 's32[1]{0}', space=sflag, size = 0x4, scoped, tag = 'scoped memory for tpu_custom_call.1']
    #allocation4 [shape = 's32[1]{0}', space=sflag, size = 0x4, scoped, tag = 'scoped memory for tpu_custom_call.1']
    #allocation5 [shape = 'u8[512]{0}', space=vmem, size = 0x400, scoped, tag = 'input window, operand 2, single buffered']
    #allocation6 [shape = 's32[1]{0}', space=sflag, size = 0x4, scoped, tag = 'scoped memory for tpu_custom_call.1']
    #allocation7 [shape = 'u8[512]{0}', space=vmem, size = 0x400, scoped, tag = 'input window, operand 4, single buffered']
    #allocation8 [shape = 'u8[16384]{0}', space=vmem, size = 0x4000, scoped, tag = 'input window, operand 5, single buffered']
    #allocation9 [shape = 's32[1]{0}', space=sflag, size = 0x4, scoped, tag = 'scoped memory for tpu_custom_call.1']
    #allocation10 [shape = 'u8[512]{0}', space=vmem, size = 0x400, scoped, tag = 'input window, operand 6, single buffered']
    #allocation11 [shape = 'u8[16384]{0}', space=vmem, size = 0x4000, scoped, tag = 'input window, operand 7, single buffered']
    #allocation12 [shape = 's32[1]{0}', space=sflag, size = 0x4, scoped, tag = 'scoped memory for tpu_custom_call.1']
    #allocation13 [shape = 'u8[1024]{0}', space=vmem, size = 0x400, scoped, tag = 'output window, operand 0, single buffered']
    %16 = vsyncpa [#allocation3], 0
    %17 = vsyncpa [#allocation6], 0
    %18 = vsyncpa [#allocation9], 0
    %19 = vsyncpa [#allocation12], 0
    %20 = vsyncpa [#allocation4], 0
    // Predicated region
    $region2: #{tpu_custom_call.1} parent=1 // pred_check
      _
    $region3: #{tpu_custom_call.1} parent=1 // pred_check_branch
      %22 = sbr.rel (0) target = $region5
    $region4: #{tpu_custom_call.1} parent=1 // pred_region
      _
    $region5: #{tpu_custom_call.1} parent=1 // pred_fallthru
      _
    // Predicated region
    $region6: #{tpu_custom_call.1} parent=1 // pred_check
      _
    $region7: #{tpu_custom_call.1} parent=1 // pred_check_branch
      %24 = sbr.rel (0) target = $region9
    $region8: #{tpu_custom_call.1} parent=1 // pred_region
      %s26 = ssub.s32 64, 64
      %27 = vsyncadd [#allocation3], %s26
      %s28 = sshll.u32 [#allocation2], 4
      %s29 = int_to_ptr.vmem [resolvable:$true] %s28
      %34 = dma.hbm_to_vmem [thread:$0]  %s1, 64, %s29, [#allocation3], 32, 32, 2
    $region9: #{tpu_custom_call.1} parent=1 // pred_fallthru
      _
    // Predicated region
    $region10: #{tpu_custom_call.1} parent=1 // pred_check
      _
    $region11: #{tpu_custom_call.1} parent=1 // pred_check_branch
      %36 = sbr.rel (0) target = $region13
    $region12: #{tpu_custom_call.1} parent=1 // pred_region
      %s38 = ssub.s32 16, 16
      %39 = vsyncadd [#allocation6], %s38
      %s41 = sshll.u32 [#allocation5], 4
      %s42 = int_to_ptr.vmem [resolvable:$true] %s41
      %44 = dma.hbm_to_vmem [thread:$0]  %s2, 16, %s42, [#allocation6]
    $region13: #{tpu_custom_call.1} parent=1 // pred_fallthru
      _
    // Predicated region
    $region14: #{tpu_custom_call.1} parent=1 // pred_check
      _
    $region15: #{tpu_custom_call.1} parent=1 // pred_check_branch
      %46 = sbr.rel (0) target = $region17
    $region16: #{tpu_custom_call.1} parent=1 // pred_region
      _
    $region17: #{tpu_custom_call.1} parent=1 // pred_fallthru
      _
    // Predicated region
    $region18: #{tpu_custom_call.1} parent=1 // pred_check
      _
    $region19: #{tpu_custom_call.1} parent=1 // pred_check_branch
      %48 = sbr.rel (0) target = $region21
    $region20: #{tpu_custom_call.1} parent=1 // pred_region
      %s50 = ssub.s32 16, 16
      %51 = vsyncadd [#allocation6], %s50
      %s53 = sshll.u32 [#allocation7], 4
      %s54 = int_to_ptr.vmem [resolvable:$true] %s53
      %56 = dma.hbm_to_vmem [thread:$0]  %s4, 16, %s54, [#allocation6]
    $region21: #{tpu_custom_call.1} parent=1 // pred_fallthru
      _
    // Predicated region
    $region22: #{tpu_custom_call.1} parent=1 // pred_check
      _
    $region23: #{tpu_custom_call.1} parent=1 // pred_check_branch
      %58 = sbr.rel (0) target = $region25
    $region24: #{tpu_custom_call.1} parent=1 // pred_region
      %s60 = ssub.s32 512, 512
      %61 = vsyncadd [#allocation9], %s60
      %s62 = sshll.u32 [#allocation8], 4
      %s63 = int_to_ptr.vmem [resolvable:$true] %s62
      %68 = dma.hbm_to_vmem [thread:$0]  %s5, 512, %s63, [#allocation9], 64, 64, 4
    $region25: #{tpu_custom_call.1} parent=1 // pred_fallthru
      _
    // Predicated region
    $region26: #{tpu_custom_call.1} parent=1 // pred_check
      _
    $region27: #{tpu_custom_call.1} parent=1 // pred_check_branch
      %70 = sbr.rel (0) target = $region29
    $region28: #{tpu_custom_call.1} parent=1 // pred_region
      %s72 = ssub.s32 16, 16
      %73 = vsyncadd [#allocation9], %s72
      %s75 = sshll.u32 [#allocation10], 4
      %s76 = int_to_ptr.vmem [resolvable:$true] %s75
      %78 = dma.hbm_to_vmem [thread:$0]  %s6, 16, %s76, [#allocation9]
    $region29: #{tpu_custom_call.1} parent=1 // pred_fallthru
      _
    // Predicated region
    $region30: #{tpu_custom_call.1} parent=1 // pred_check
      _
    $region31: #{tpu_custom_call.1} parent=1 // pred_check_branch
      %80 = sbr.rel (0) target = $region33
    $region32: #{tpu_custom_call.1} parent=1 // pred_region
      %s82 = ssub.s32 512, 512
      %83 = vsyncadd [#allocation12], %s82
      %s84 = sshll.u32 [#allocation11], 4
      %s85 = int_to_ptr.vmem [resolvable:$true] %s84
      %90 = dma.hbm_to_vmem [thread:$0]  %s7, 512, %s85, [#allocation12], 64, 64, 4
    $region33: #{tpu_custom_call.1} parent=1 // pred_fallthru
      _
    // Predicated region
    $region34: #{tpu_custom_call.1} parent=1 // pred_check
      _
    $region35: #{tpu_custom_call.1} parent=1 // pred_check_branch
      %92 = sbr.rel (0) target = $region37
    $region36: #{tpu_custom_call.1} parent=1 // pred_region
      _
    $region37: #{tpu_custom_call.1} parent=1 // pred_fallthru
      _
    // Predicated region
    $region38: #{tpu_custom_call.1} parent=1 // pred_check
      _
    $region39: #{tpu_custom_call.1} parent=1 // pred_check_branch
      %94 = sbr.rel (0) target = $region41
    $region40: #{tpu_custom_call.1} parent=1 // pred_region
      _
    $region41: #{tpu_custom_call.1} parent=1 // pred_fallthru
      _
    // Predicated region
    $region42: #{tpu_custom_call.1} parent=1 // pred_check
      _
    $region43: #{tpu_custom_call.1} parent=1 // pred_check_branch
      %96 = sbr.rel (0) target = $region45
    $region44: #{tpu_custom_call.1} parent=1 // pred_region
      _
    $region45: #{tpu_custom_call.1} parent=1 // pred_fallthru
      _
    // Predicated region
    $region46: #{tpu_custom_call.1} parent=1 // pred_check
      _
    $region47: #{tpu_custom_call.1} parent=1 // pred_check_branch
      %98 = sbr.rel (0) target = $region49
    $region48: #{tpu_custom_call.1} parent=1 // pred_region
      %99 = dma.done [#allocation3], 64
    $region49: #{tpu_custom_call.1} parent=1 // pred_fallthru
      _
    // Predicated region
    $region50: #{tpu_custom_call.1} parent=1 // pred_check
      _
    $region51: #{tpu_custom_call.1} parent=1 // pred_check_branch
      %101 = sbr.rel (0) target = $region53
    $region52: #{tpu_custom_call.1} parent=1 // pred_region
      %102 = dma.done [#allocation6], 16
    $region53: #{tpu_custom_call.1} parent=1 // pred_fallthru
      _
    // Predicated region
    $region54: #{tpu_custom_call.1} parent=1 // pred_check
      _
    $region55: #{tpu_custom_call.1} parent=1 // pred_check_branch
      %104 = sbr.rel (0) target = $region57
    $region56: #{tpu_custom_call.1} parent=1 // pred_region
      %105 = dma.done [#allocation6], 16
    $region57: #{tpu_custom_call.1} parent=1 // pred_fallthru
      _
    // Predicated region
    $region58: #{tpu_custom_call.1} parent=1 // pred_check
      _
    $region59: #{tpu_custom_call.1} parent=1 // pred_check_branch
      %107 = sbr.rel (0) target = $region61
    $region60: #{tpu_custom_call.1} parent=1 // pred_region
      %108 = dma.done [#allocation9], 512
    $region61: #{tpu_custom_call.1} parent=1 // pred_fallthru
      _
    // Predicated region
    $region62: #{tpu_custom_call.1} parent=1 // pred_check
      _
    $region63: #{tpu_custom_call.1} parent=1 // pred_check_branch
      %110 = sbr.rel (0) target = $region65
    $region64: #{tpu_custom_call.1} parent=1 // pred_region
      %111 = dma.done [#allocation9], 16
    $region65: #{tpu_custom_call.1} parent=1 // pred_fallthru
      _
    // Predicated region
    $region66: #{tpu_custom_call.1} parent=1 // pred_check
      _
    $region67: #{tpu_custom_call.1} parent=1 // pred_check_branch
      %113 = sbr.rel (0) target = $region69
    $region68: #{tpu_custom_call.1} parent=1 // pred_region
      %114 = dma.done [#allocation12], 512
    $region69: #{tpu_custom_call.1} parent=1 // pred_fallthru
      _
    %v116 = vlaneseq
    %v117 = vshrl.u32 %v116, 7
    %v118 = vadd.s32 %v117, 8
    %v119 = vadd.s32 %v117, 16
    %v120 = vadd.s32 %v117, 24
    %vm121 = vcmp.lt.s32.totalorder %v117, 0
    %v122 = vsub.s32 0, %v117
    %v123 = vsel %vm121, %v122, %v117
    %v124 = vshrl.u32 %v123, 4
    %v125 = vand.u32 %v123, 15
    %v126 = vsub.s32 0, %v125
    %v127 = vsel %vm121, %v126, %v125
    %vm128 = vcmp.lt.s32.totalorder %v118, 0
    %v129 = vsub.s32 0, %v118
    %v130 = vsel %vm128, %v129, %v118
    %v131 = vshrl.u32 %v130, 4
    %v132 = vand.u32 %v130, 15
    %v133 = vsub.s32 0, %v132
    %v134 = vsel %vm128, %v133, %v132
    %vm135 = vcmp.lt.s32.totalorder %v119, 0
    %v136 = vsub.s32 0, %v119
    %v137 = vsel %vm135, %v136, %v119
    %v138 = vshrl.u32 %v137, 4
    %v139 = vand.u32 %v137, 15
    %v140 = vsub.s32 0, %v139
    %v141 = vsel %vm135, %v140, %v139
    %vm142 = vcmp.lt.s32.totalorder %v120, 0
    %v143 = vsub.s32 0, %v120
    %v144 = vsel %vm142, %v143, %v120
    %v145 = vshrl.u32 %v144, 4
    %v146 = vand.u32 %v144, 15
    %v147 = vsub.s32 0, %v146
    %v148 = vsel %vm142, %v147, %v146
    %vm149 = vcmp.ne.s32.totalorder %v127, 0
    %vm150 = vcmp.ne.s32.totalorder %v134, 0
    %vm151 = vcmp.ne.s32.totalorder %v141, 0
    %vm152 = vcmp.ne.s32.totalorder %v148, 0
    %vm153 = vcmp.lt.s32.totalorder %v127, 0
    %vm154 = vcmp.lt.s32.totalorder %v134, 0
    %vm155 = vcmp.lt.s32.totalorder %v141, 0
    %vm156 = vcmp.lt.s32.totalorder %v148, 0
    %vm157 = vmand %vm153, %vm149
    %vm158 = vmand %vm154, %vm150
    %vm159 = vmand %vm155, %vm151
    %vm160 = vmand %vm156, %vm152
    %v161 = vadd.s32 %v127, 16
    %v162 = vadd.s32 %v134, 16
    %v163 = vadd.s32 %v141, 16
    %v164 = vadd.s32 %v148, 16
    %v165 = vsel %vm157, %v161, %v127
    %v166 = vsel %vm158, %v162, %v134
    %v167 = vsel %vm159, %v163, %v141
    %v168 = vsel %vm160, %v164, %v148
    %v169 = vld [vmem:[%s0] sm:$0xff]
    %v170 = vld [vmem:[%s0 + $0x8] sm:$0xff]
    %v171 = vld [vmem:[%s0 + $0x10] sm:$0xff]
    %v172 = vld [vmem:[%s0 + $0x18] sm:$0xff]
    %v173 = vld [vmem:[#allocation5] sm:$0x1]
    %v174 = vrot.slane %v169, 7
    %v175 = vrot.slane %v170, 7
    %v176 = vrot.slane %v171, 7
    %v177 = vrot.slane %v172, 7
    %vm178 = vcmp.lt.s32.totalorder %v117, 1
    %v179 = vsel %vm178, %v176, %v177
    %v180 = vsel %vm178, %v175, %v176
    %v181 = vsel %vm178, %v174, %v175
    %v182 = vsel %vm178, %v177, %v174
    %vm183 = vcmp.ge.s32.totalorder %v165, 1
    %vm184 = vcmp.ge.s32.totalorder %v166, 1
    %vm185 = vcmp.ge.s32.totalorder %v167, 1
    %vm186 = vcmp.ge.s32.totalorder %v168, 1
    %v187 = vsel %vm183, 1, 0
    %v188 = vsel %vm184, 1, 0
    %v189 = vsel %vm185, 1, 0
    %v190 = vsel %vm186, 1, 0
    %vm191 = vcmp.eq.s32.totalorder %v187, 1
    %vm192 = vcmp.eq.s32.totalorder %v188, 1
    %vm193 = vcmp.eq.s32.totalorder %v189, 1
    %vm194 = vcmp.eq.s32.totalorder %v190, 1
    %v195 = vsel %vm191, %v182, 0.0
    %v196 = vsel %vm192, %v181, 0.0
    %v197 = vsel %vm193, %v180, 0.0
    %v198 = vsel %vm194, %v179, 0.0
    %v199 = vpack.c.bf16 %v196, %v195
    %v200 = vpack.c.bf16 %v198, %v197
    %v201 = vld [vmem:[#allocation2] sm:$0x3]
    %vm202 = vcmask 31744
    %v204 = vsel %vm202, %v199, 0
    %v207 = vsel %vm202, %v200, 0
    %vm209 = vcmask 1041408
    %v211 = vsel %vm209, %v201, 0
    %213 = vmatprep.subr.bf16.mxu0 0
    %214 = vmatpush1.bf16.msra.mxu0 0
    %215 = vmatprep.subr.bf16.mxu0 0
    %216 = vmatpush1.bf16.msra.mxu0 0
    %217 = vmatprep.subr.bf16.mxu0 0
    %218 = vmatpush1.bf16.msra.mxu0 0
    %219 = vmatprep.subr.bf16.mxu0 0
    %220 = vmatpush1.bf16.msra.mxu0 0
    %221 = vmatprep.subr.bf16.mxu0 0
    %222 = vmatpush1.bf16.msra.mxu0 0
    %223 = vmatprep.subr.bf16.mxu0 0
    %224 = vmatpush1.bf16.msra.mxu0 0
    %225 = vmatprep.subr.bf16.mxu0 0
    %226 = vmatpush1.bf16.msra.mxu0 0
    %227 = vmatprep.subr.bf16.mxu0 0
    %228 = vmatpush1.bf16.msra.mxu0 %v211
    %229 = vmatprep.subr.bf16.mxu0 0
    %230 = vmatpush2.bf16.msra.mxu0 0
    %231 = vmatprep.subr.bf16.mxu0 0
    %232 = vmatpush2.bf16.msra.mxu0 0
    %233 = vmatprep.subr.bf16.mxu0 0
    %234 = vmatpush2.bf16.msra.mxu0 0
    %235 = vmatprep.subr.bf16.mxu0 0
    %236 = vmatpush2.bf16.msra.mxu0 0
    %237 = vmatprep.subr.bf16.mxu0 0
    %238 = vmatpush2.bf16.msra.mxu0 0
    %239 = vmatprep.subr.bf16.mxu0 0
    %240 = vmatpush2.bf16.msra.mxu0 0
    %241 = vmatprep.subr.bf16.mxu0 0
    %242 = vmatpush2.bf16.msra.mxu0 0
    %243 = vmatprep.subr.bf16.mxu0 0
    %244 = vmatpush2.bf16.msra.mxu0 0
    %245 = vmatprep.mubr.bf16.mxu0 0
    %246 = vmatmul.mubr.bf16.gmra.mxu0 %v204
    %v247 = vpop.f32.mrf.mxu0
    %v248 = vadd.f32 0.0, %v247
    %v249 = vpop.f32.mrf.mxu0
    %v250 = vpop.f32.mrf.mxu0
    %v251 = vadd.f32 0.0, %v250
    %v252 = vpop.f32.mrf.mxu0
    %253 = vmatprep.mubr.bf16.mxu0 0
    %254 = vmatmul.mubr.bf16.gmra.mxu0 %v207
    %v255 = vpop.f32.mrf.mxu0
    %v256 = vadd.f32 0.0, %v255
    %v257 = vpop.f32.mrf.mxu0
    %v258 = vpop.f32.mrf.mxu0
    %v259 = vadd.f32 0.0, %v258
    %v260 = vpop.f32.mrf.mxu0
    %261 = vdwg.mxu0
    %v263 = vlaneseq
    %v264 = vshrl.u32 %v263, 7
    %v265 = vsub.s32 0, %v264
    %v266 = vrot.slane %v173, %v265
    %v268 = vadd.f32 %v266, %v248
    %v269 = vadd.f32 %v266, %v251
    %v270 = vadd.f32 %v266, %v256
    %v271 = vadd.f32 %v266, %v259
    %v272 = vpack.c.bf16 %v170, %v169
    %v273 = vpack.c.bf16 %v172, %v171
    %s274 = scalar_lea.vmem [#allocation2], 2
    %v275 = vld [vmem:[%s274] sm:$0x3]
    %v277 = vsel %vm202, %v272, 0
    %v280 = vsel %vm202, %v273, 0
    %v283 = vsel %vm209, %v275, 0
    %285 = vmatprep.subr.bf16.mxu0 0
    %286 = vmatpush1.bf16.msra.mxu0 0
    %287 = vmatprep.subr.bf16.mxu0 0
    %288 = vmatpush1.bf16.msra.mxu0 0
    %289 = vmatprep.subr.bf16.mxu0 0
    %290 = vmatpush1.bf16.msra.mxu0 0
    %291 = vmatprep.subr.bf16.mxu0 0
    %292 = vmatpush1.bf16.msra.mxu0 0
    %293 = vmatprep.subr.bf16.mxu0 0
    %294 = vmatpush1.bf16.msra.mxu0 0
    %295 = vmatprep.subr.bf16.mxu0 0
    %296 = vmatpush1.bf16.msra.mxu0 0
    %297 = vmatprep.subr.bf16.mxu0 0
    %298 = vmatpush1.bf16.msra.mxu0 0
    %299 = vmatprep.subr.bf16.mxu0 0
    %300 = vmatpush1.bf16.msra.mxu0 %v283
    %301 = vmatprep.subr.bf16.mxu0 0
    %302 = vmatpush2.bf16.msra.mxu0 0
    %303 = vmatprep.subr.bf16.mxu0 0
    %304 = vmatpush2.bf16.msra.mxu0 0
    %305 = vmatprep.subr.bf16.mxu0 0
    %306 = vmatpush2.bf16.msra.mxu0 0
    %307 = vmatprep.subr.bf16.mxu0 0
    %308 = vmatpush2.bf16.msra.mxu0 0
    %309 = vmatprep.subr.bf16.mxu0 0
    %310 = vmatpush2.bf16.msra.mxu0 0
    %311 = vmatprep.subr.bf16.mxu0 0
    %312 = vmatpush2.bf16.msra.mxu0 0
    %313 = vmatprep.subr.bf16.mxu0 0
    %314 = vmatpush2.bf16.msra.mxu0 0
    %315 = vmatprep.subr.bf16.mxu0 0
    %316 = vmatpush2.bf16.msra.mxu0 0
    %317 = vmatprep.mubr.bf16.mxu0 0
    %318 = vmatmul.mubr.bf16.gmra.mxu0 %v277
    %v319 = vpop.f32.mrf.mxu0
    %v320 = vadd.f32 0.0, %v319
    %v321 = vpop.f32.mrf.mxu0
    %v322 = vpop.f32.mrf.mxu0
    %v323 = vadd.f32 0.0, %v322
    %v324 = vpop.f32.mrf.mxu0
    %325 = vmatprep.mubr.bf16.mxu0 0
    %326 = vmatmul.mubr.bf16.gmra.mxu0 %v280
    %v327 = vpop.f32.mrf.mxu0
    %v328 = vadd.f32 0.0, %v327
    %v329 = vpop.f32.mrf.mxu0
    %v330 = vpop.f32.mrf.mxu0
    %v331 = vadd.f32 0.0, %v330
    %v332 = vpop.f32.mrf.mxu0
    %333 = vdwg.mxu0
    %v334 = vadd.f32 %v268, %v320
    %v335 = vadd.f32 %v269, %v323
    %v336 = vadd.f32 %v270, %v328
    %v337 = vadd.f32 %v271, %v331
    %v338 = vmax.f32 %v334, 0.0
    %v339 = vmax.f32 %v335, 0.0
    %v340 = vmax.f32 %v336, 0.0
    %v341 = vmax.f32 %v337, 0.0
    %v342 = vld [vmem:[#allocation7] sm:$0x1]
    %v343 = vrot.slane %v338, 7
    %v344 = vrot.slane %v339, 7
    %v345 = vrot.slane %v340, 7
    %v346 = vrot.slane %v341, 7
    %v347 = vsel %vm178, %v345, %v346
    %v348 = vsel %vm178, %v344, %v345
    %v349 = vsel %vm178, %v343, %v344
    %v350 = vsel %vm178, %v346, %v343
    %v351 = vsel %vm191, %v350, 0.0
    %v352 = vsel %vm192, %v349, 0.0
    %v353 = vsel %vm193, %v348, 0.0
    %v354 = vsel %vm194, %v347, 0.0
    %v355 = vpack.c.bf16 %v352, %v351
    %v356 = vpack.c.bf16 %v354, %v353
    %v357 = vld [vmem:[%s3] sm:$0xf]
    %v358 = vld [vmem:[%s3 + $0x4] sm:$0xf]
    %v359 = vld [vmem:[%s3 + $0x8] sm:$0xf]
    %v360 = vld [vmem:[%s3 + $0xc] sm:$0xf]
    %v365 = vunpack.c.l.b16 %v357
    %v366 = vunpack.c.l.b16 %v358
    %v367 = vunpack.c.l.b16 %v359
    %v368 = vunpack.c.l.b16 %v360
    %v369 = vpack.c.b16 %v366, %v365
    %v370 = vpack.c.b16 %v368, %v367
    %vm373 = vcmask 261120
    %v375 = vsel %vm373, %v355, 0
    %v378 = vsel %vm373, %v356, 0
    %380 = vmatprep.subr.bf16.mxu0 0
    %381 = vmatpush1.bf16.msra.mxu0 0
    %382 = vmatprep.subr.bf16.mxu0 0
    %383 = vmatpush1.bf16.msra.mxu0 0
    %384 = vmatprep.subr.bf16.mxu0 0
    %385 = vmatpush1.bf16.msra.mxu0 0
    %386 = vmatprep.subr.bf16.mxu0 0
    %387 = vmatpush1.bf16.msra.mxu0 0
    %388 = vmatprep.subr.bf16.mxu0 0
    %389 = vmatpush1.bf16.msra.mxu0 0
    %390 = vmatprep.subr.bf16.mxu0 0
    %391 = vmatpush1.bf16.msra.mxu0 0
    %392 = vmatprep.subr.bf16.mxu0 0
    %393 = vmatpush1.bf16.msra.mxu0 %v370
    %394 = vmatprep.subr.bf16.mxu0 0
    %395 = vmatpush1.bf16.msra.mxu0 %v369
    %396 = vmatprep.subr.bf16.mxu0 0
    %397 = vmatpush2.bf16.msra.mxu0 0
    %398 = vmatprep.subr.bf16.mxu0 0
    %399 = vmatpush2.bf16.msra.mxu0 0
    %400 = vmatprep.subr.bf16.mxu0 0
    %401 = vmatpush2.bf16.msra.mxu0 0
    %402 = vmatprep.subr.bf16.mxu0 0
    %403 = vmatpush2.bf16.msra.mxu0 0
    %404 = vmatprep.subr.bf16.mxu0 0
    %405 = vmatpush2.bf16.msra.mxu0 0
    %406 = vmatprep.subr.bf16.mxu0 0
    %407 = vmatpush2.bf16.msra.mxu0 0
    %408 = vmatprep.subr.bf16.mxu0 0
    %409 = vmatpush2.bf16.msra.mxu0 0
    %410 = vmatprep.subr.bf16.mxu0 0
    %411 = vmatpush2.bf16.msra.mxu0 0
    %412 = vmatprep.mubr.bf16.mxu0 0
    %413 = vmatmul.mubr.bf16.gmra.mxu0 %v375
    %v414 = vpop.f32.mrf.mxu0
    %v415 = vadd.f32 0.0, %v414
    %v416 = vpop.f32.mrf.mxu0
    %v417 = vpop.f32.mrf.mxu0
    %v418 = vadd.f32 0.0, %v417
    %v419 = vpop.f32.mrf.mxu0
    %420 = vmatprep.mubr.bf16.mxu0 0
    %421 = vmatmul.mubr.bf16.gmra.mxu0 %v378
    %v422 = vpop.f32.mrf.mxu0
    %v423 = vadd.f32 0.0, %v422
    %v424 = vpop.f32.mrf.mxu0
    %v425 = vpop.f32.mrf.mxu0
    %v426 = vadd.f32 0.0, %v425
    %v427 = vpop.f32.mrf.mxu0
    %428 = vdwg.mxu0
    %v430 = vlaneseq
    %v431 = vshrl.u32 %v430, 7
    %v432 = vsub.s32 0, %v431
    %v433 = vrot.slane %v342, %v432
    %v435 = vadd.f32 %v433, %v415
    %v436 = vadd.f32 %v433, %v418
    %v437 = vadd.f32 %v433, %v423
    %v438 = vadd.f32 %v433, %v426
    %v439 = vpack.c.bf16 %v339, %v338
    %v440 = vpack.c.bf16 %v341, %v340
    %s441 = scalar_lea.vmem %s3, 16
    %v442 = vld [vmem:[%s441] sm:$0xf]
    %v443 = vld [vmem:[%s441 + $0x4] sm:$0xf]
    %v444 = vld [vmem:[%s441 + $0x8] sm:$0xf]
    %v445 = vld [vmem:[%s441 + $0xc] sm:$0xf]
    %v450 = vunpack.c.l.b16 %v442
    %v451 = vunpack.c.l.b16 %v443
    %v452 = vunpack.c.l.b16 %v444
    %v453 = vunpack.c.l.b16 %v445
    %v454 = vpack.c.b16 %v451, %v450
    %v455 = vpack.c.b16 %v453, %v452
    %v459 = vsel %vm373, %v439, 0
    %v462 = vsel %vm373, %v440, 0
    %464 = vmatprep.subr.bf16.mxu0 0
    %465 = vmatpush1.bf16.msra.mxu0 0
    %466 = vmatprep.subr.bf16.mxu0 0
    %467 = vmatpush1.bf16.msra.mxu0 0
    %468 = vmatprep.subr.bf16.mxu0 0
    %469 = vmatpush1.bf16.msra.mxu0 0
    %470 = vmatprep.subr.bf16.mxu0 0
    %471 = vmatpush1.bf16.msra.mxu0 0
    %472 = vmatprep.subr.bf16.mxu0 0
    %473 = vmatpush1.bf16.msra.mxu0 0
    %474 = vmatprep.subr.bf16.mxu0 0
    %475 = vmatpush1.bf16.msra.mxu0 0
    %476 = vmatprep.subr.bf16.mxu0 0
    %477 = vmatpush1.bf16.msra.mxu0 %v455
    %478 = vmatprep.subr.bf16.mxu0 0
    %479 = vmatpush1.bf16.msra.mxu0 %v454
    %480 = vmatprep.subr.bf16.mxu0 0
    %481 = vmatpush2.bf16.msra.mxu0 0
    %482 = vmatprep.subr.bf16.mxu0 0
    %483 = vmatpush2.bf16.msra.mxu0 0
    %484 = vmatprep.subr.bf16.mxu0 0
    %485 = vmatpush2.bf16.msra.mxu0 0
    %486 = vmatprep.subr.bf16.mxu0 0
    %487 = vmatpush2.bf16.msra.mxu0 0
    %488 = vmatprep.subr.bf16.mxu0 0
    %489 = vmatpush2.bf16.msra.mxu0 0
    %490 = vmatprep.subr.bf16.mxu0 0
    %491 = vmatpush2.bf16.msra.mxu0 0
    %492 = vmatprep.subr.bf16.mxu0 0
    %493 = vmatpush2.bf16.msra.mxu0 0
    %494 = vmatprep.subr.bf16.mxu0 0
    %495 = vmatpush2.bf16.msra.mxu0 0
    %496 = vmatprep.mubr.bf16.mxu0 0
    %497 = vmatmul.mubr.bf16.gmra.mxu0 %v459
    %v498 = vpop.f32.mrf.mxu0
    %v499 = vadd.f32 0.0, %v498
    %v500 = vpop.f32.mrf.mxu0
    %v501 = vpop.f32.mrf.mxu0
    %v502 = vadd.f32 0.0, %v501
    %v503 = vpop.f32.mrf.mxu0
    %504 = vmatprep.mubr.bf16.mxu0 0
    %505 = vmatmul.mubr.bf16.gmra.mxu0 %v462
    %v506 = vpop.f32.mrf.mxu0
    %v507 = vadd.f32 0.0, %v506
    %v508 = vpop.f32.mrf.mxu0
    %v509 = vpop.f32.mrf.mxu0
    %v510 = vadd.f32 0.0, %v509
    %v511 = vpop.f32.mrf.mxu0
    %512 = vdwg.mxu0
    %v513 = vadd.f32 %v435, %v499
    %v514 = vadd.f32 %v436, %v502
    %v515 = vadd.f32 %v437, %v507
    %v516 = vadd.f32 %v438, %v510
    %v517 = vmax.f32 %v513, 0.0
    %v518 = vmax.f32 %v514, 0.0
    %v519 = vmax.f32 %v515, 0.0
    %v520 = vmax.f32 %v516, 0.0
    %525 = vrot.lane.b32.xlu0 %v334, 96
    %v526 = vpop.permute.xlu0 %525
    %527 = vrot.lane.b32.xlu0 %v335, 96
    %v528 = vpop.permute.xlu0 %527
    %529 = vrot.lane.b32.xlu0 %v336, 96
    %v530 = vpop.permute.xlu0 %529
    %531 = vrot.lane.b32.xlu0 %v337, 96
    %v532 = vpop.permute.xlu0 %531
    %v537 = vadd.f32 %v517, %v526
    %v538 = vadd.f32 %v518, %v528
    %v539 = vadd.f32 %v519, %v530
    %v540 = vadd.f32 %v520, %v532
    %v541 = vmax.f32 %v537, 0.0
    %v542 = vmax.f32 %v538, 0.0
    %v543 = vmax.f32 %v539, 0.0
    %v544 = vmax.f32 %v540, 0.0
    %v545 = vld [vmem:[#allocation10] sm:$0x1]
    %v546 = vrot.slane %v541, 6
    %v547 = vrot.slane %v542, 6
    %v548 = vrot.slane %v543, 6
    %v549 = vrot.slane %v544, 6
    %vm550 = vcmp.lt.s32.totalorder %v117, 2
    %v551 = vsel %vm550, %v548, %v549
    %v552 = vsel %vm550, %v547, %v548
    %v553 = vsel %vm550, %v546, %v547
    %v554 = vsel %vm550, %v549, %v546
    %vm555 = vcmp.ge.s32.totalorder %v165, 2
    %vm556 = vcmp.ge.s32.totalorder %v166, 2
    %vm557 = vcmp.ge.s32.totalorder %v167, 2
    %vm558 = vcmp.ge.s32.totalorder %v168, 2
    %v559 = vsel %vm555, 1, 0
    %v560 = vsel %vm556, 1, 0
    %v561 = vsel %vm557, 1, 0
    %v562 = vsel %vm558, 1, 0
    %vm563 = vcmp.eq.s32.totalorder %v559, 1
    %vm564 = vcmp.eq.s32.totalorder %v560, 1
    %vm565 = vcmp.eq.s32.totalorder %v561, 1
    %vm566 = vcmp.eq.s32.totalorder %v562, 1
    %v567 = vsel %vm563, %v554, 0.0
    %v568 = vsel %vm564, %v553, 0.0
    %v569 = vsel %vm565, %v552, 0.0
    %v570 = vsel %vm566, %v551, 0.0
    %v571 = vpack.c.bf16 %v568, %v567
    %v572 = vpack.c.bf16 %v570, %v569
    %v573 = vld [vmem:[#allocation8] sm:$0xf]
    %v574 = vld [vmem:[#allocation8 + $0x4] sm:$0xf]
    %v575 = vld [vmem:[#allocation8 + $0x8] sm:$0xf]
    %v576 = vld [vmem:[#allocation8 + $0xc] sm:$0xf]
    %v581 = vunpack.c.l.b16 %v573
    %v582 = vunpack.c.l.b16 %v574
    %v583 = vunpack.c.l.b16 %v575
    %v584 = vunpack.c.l.b16 %v576
    %v585 = vpack.c.b16 %v582, %v581
    %v586 = vpack.c.b16 %v584, %v583
    %v590 = vsel %vm373, %v571, 0
    %v593 = vsel %vm373, %v572, 0
    %595 = vmatprep.subr.bf16.mxu0 0
    %596 = vmatpush1.bf16.msra.mxu0 0
    %597 = vmatprep.subr.bf16.mxu0 0
    %598 = vmatpush1.bf16.msra.mxu0 0
    %599 = vmatprep.subr.bf16.mxu0 0
    %600 = vmatpush1.bf16.msra.mxu0 0
    %601 = vmatprep.subr.bf16.mxu0 0
    %602 = vmatpush1.bf16.msra.mxu0 0
    %603 = vmatprep.subr.bf16.mxu0 0
    %604 = vmatpush1.bf16.msra.mxu0 0
    %605 = vmatprep.subr.bf16.mxu0 0
    %606 = vmatpush1.bf16.msra.mxu0 0
    %607 = vmatprep.subr.bf16.mxu0 0
    %608 = vmatpush1.bf16.msra.mxu0 %v586
    %609 = vmatprep.subr.bf16.mxu0 0
    %610 = vmatpush1.bf16.msra.mxu0 %v585
    %611 = vmatprep.subr.bf16.mxu0 0
    %612 = vmatpush2.bf16.msra.mxu0 0
    %613 = vmatprep.subr.bf16.mxu0 0
    %614 = vmatpush2.bf16.msra.mxu0 0
    %615 = vmatprep.subr.bf16.mxu0 0
    %616 = vmatpush2.bf16.msra.mxu0 0
    %617 = vmatprep.subr.bf16.mxu0 0
    %618 = vmatpush2.bf16.msra.mxu0 0
    %619 = vmatprep.subr.bf16.mxu0 0
    %620 = vmatpush2.bf16.msra.mxu0 0
    %621 = vmatprep.subr.bf16.mxu0 0
    %622 = vmatpush2.bf16.msra.mxu0 0
    %623 = vmatprep.subr.bf16.mxu0 0
    %624 = vmatpush2.bf16.msra.mxu0 0
    %625 = vmatprep.subr.bf16.mxu0 0
    %626 = vmatpush2.bf16.msra.mxu0 0
    %627 = vmatprep.mubr.bf16.mxu0 0
    %628 = vmatmul.mubr.bf16.gmra.mxu0 %v590
    %v629 = vpop.f32.mrf.mxu0
    %v630 = vadd.f32 0.0, %v629
    %v631 = vpop.f32.mrf.mxu0
    %v632 = vpop.f32.mrf.mxu0
    %v633 = vadd.f32 0.0, %v632
    %v634 = vpop.f32.mrf.mxu0
    %635 = vmatprep.mubr.bf16.mxu0 0
    %636 = vmatmul.mubr.bf16.gmra.mxu0 %v593
    %v637 = vpop.f32.mrf.mxu0
    %v638 = vadd.f32 0.0, %v637
    %v639 = vpop.f32.mrf.mxu0
    %v640 = vpop.f32.mrf.mxu0
    %v641 = vadd.f32 0.0, %v640
    %v642 = vpop.f32.mrf.mxu0
    %643 = vdwg.mxu0
    %v645 = vlaneseq
    %v646 = vshrl.u32 %v645, 7
    %v647 = vsub.s32 0, %v646
    %v648 = vrot.slane %v545, %v647
    %v650 = vadd.f32 %v648, %v630
    %v651 = vadd.f32 %v648, %v633
    %v652 = vadd.f32 %v648, %v638
    %v653 = vadd.f32 %v648, %v641
    %v654 = vpack.c.bf16 %v542, %v541
    %v655 = vpack.c.bf16 %v544, %v543
    %s656 = scalar_lea.vmem [#allocation8], 16
    %v657 = vld [vmem:[%s656] sm:$0xf]
    %v658 = vld [vmem:[%s656 + $0x4] sm:$0xf]
    %v659 = vld [vmem:[%s656 + $0x8] sm:$0xf]
    %v660 = vld [vmem:[%s656 + $0xc] sm:$0xf]
    %v665 = vunpack.c.l.b16 %v657
    %v666 = vunpack.c.l.b16 %v658
    %v667 = vunpack.c.l.b16 %v659
    %v668 = vunpack.c.l.b16 %v660
    %v669 = vpack.c.b16 %v666, %v665
    %v670 = vpack.c.b16 %v668, %v667
    %v674 = vsel %vm373, %v654, 0
    %v677 = vsel %vm373, %v655, 0
    %679 = vmatprep.subr.bf16.mxu0 0
    %680 = vmatpush1.bf16.msra.mxu0 0
    %681 = vmatprep.subr.bf16.mxu0 0
    %682 = vmatpush1.bf16.msra.mxu0 0
    %683 = vmatprep.subr.bf16.mxu0 0
    %684 = vmatpush1.bf16.msra.mxu0 0
    %685 = vmatprep.subr.bf16.mxu0 0
    %686 = vmatpush1.bf16.msra.mxu0 0
    %687 = vmatprep.subr.bf16.mxu0 0
    %688 = vmatpush1.bf16.msra.mxu0 0
    %689 = vmatprep.subr.bf16.mxu0 0
    %690 = vmatpush1.bf16.msra.mxu0 0
    %691 = vmatprep.subr.bf16.mxu0 0
    %692 = vmatpush1.bf16.msra.mxu0 %v670
    %693 = vmatprep.subr.bf16.mxu0 0
    %694 = vmatpush1.bf16.msra.mxu0 %v669
    %695 = vmatprep.subr.bf16.mxu0 0
    %696 = vmatpush2.bf16.msra.mxu0 0
    %697 = vmatprep.subr.bf16.mxu0 0
    %698 = vmatpush2.bf16.msra.mxu0 0
    %699 = vmatprep.subr.bf16.mxu0 0
    %700 = vmatpush2.bf16.msra.mxu0 0
    %701 = vmatprep.subr.bf16.mxu0 0
    %702 = vmatpush2.bf16.msra.mxu0 0
    %703 = vmatprep.subr.bf16.mxu0 0
    %704 = vmatpush2.bf16.msra.mxu0 0
    %705 = vmatprep.subr.bf16.mxu0 0
    %706 = vmatpush2.bf16.msra.mxu0 0
    %707 = vmatprep.subr.bf16.mxu0 0
    %708 = vmatpush2.bf16.msra.mxu0 0
    %709 = vmatprep.subr.bf16.mxu0 0
    %710 = vmatpush2.bf16.msra.mxu0 0
    %711 = vmatprep.mubr.bf16.mxu0 0
    %712 = vmatmul.mubr.bf16.gmra.mxu0 %v674
    %v713 = vpop.f32.mrf.mxu0
    %v714 = vadd.f32 0.0, %v713
    %v715 = vpop.f32.mrf.mxu0
    %v716 = vpop.f32.mrf.mxu0
    %v717 = vadd.f32 0.0, %v716
    %v718 = vpop.f32.mrf.mxu0
    %719 = vmatprep.mubr.bf16.mxu0 0
    %720 = vmatmul.mubr.bf16.gmra.mxu0 %v677
    %v721 = vpop.f32.mrf.mxu0
    %v722 = vadd.f32 0.0, %v721
    %v723 = vpop.f32.mrf.mxu0
    %v724 = vpop.f32.mrf.mxu0
    %v725 = vadd.f32 0.0, %v724
    %v726 = vpop.f32.mrf.mxu0
    %727 = vdwg.mxu0
    %v728 = vadd.f32 %v650, %v714
    %v729 = vadd.f32 %v651, %v717
    %v730 = vadd.f32 %v652, %v722
    %v731 = vadd.f32 %v653, %v725
    %v732 = vmax.f32 %v728, 0.0
    %v733 = vmax.f32 %v729, 0.0
    %v734 = vmax.f32 %v730, 0.0
    %v735 = vmax.f32 %v731, 0.0
    %v736 = vld [vmem:[%s8] sm:$0x1]
    %v737 = vrot.slane %v732, 6
    %v738 = vrot.slane %v733, 6
    %v739 = vrot.slane %v734, 6
    %v740 = vrot.slane %v735, 6
    %v741 = vsel %vm550, %v739, %v740
    %v742 = vsel %vm550, %v738, %v739
    %v743 = vsel %vm550, %v737, %v738
    %v744 = vsel %vm550, %v740, %v737
    %v745 = vsel %vm563, %v744, 0.0
    %v746 = vsel %vm564, %v743, 0.0
    %v747 = vsel %vm565, %v742, 0.0
    %v748 = vsel %vm566, %v741, 0.0
    %v749 = vpack.c.bf16 %v746, %v745
    %v750 = vpack.c.bf16 %v748, %v747
    %v751 = vld [vmem:[#allocation11] sm:$0xf]
    %v752 = vld [vmem:[#allocation11 + $0x4] sm:$0xf]
    %v753 = vld [vmem:[#allocation11 + $0x8] sm:$0xf]
    %v754 = vld [vmem:[#allocation11 + $0xc] sm:$0xf]
    %v759 = vunpack.c.l.b16 %v751
    %v760 = vunpack.c.l.b16 %v752
    %v761 = vunpack.c.l.b16 %v753
    %v762 = vunpack.c.l.b16 %v754
    %v763 = vpack.c.b16 %v760, %v759
    %v764 = vpack.c.b16 %v762, %v761
    %v768 = vsel %vm373, %v749, 0
    %v771 = vsel %vm373, %v750, 0
    %773 = vmatprep.subr.bf16.mxu0 0
    %774 = vmatpush1.bf16.msra.mxu0 0
    %775 = vmatprep.subr.bf16.mxu0 0
    %776 = vmatpush1.bf16.msra.mxu0 0
    %777 = vmatprep.subr.bf16.mxu0 0
    %778 = vmatpush1.bf16.msra.mxu0 0
    %779 = vmatprep.subr.bf16.mxu0 0
    %780 = vmatpush1.bf16.msra.mxu0 0
    %781 = vmatprep.subr.bf16.mxu0 0
    %782 = vmatpush1.bf16.msra.mxu0 0
    %783 = vmatprep.subr.bf16.mxu0 0
    %784 = vmatpush1.bf16.msra.mxu0 0
    %785 = vmatprep.subr.bf16.mxu0 0
    %786 = vmatpush1.bf16.msra.mxu0 %v764
    %787 = vmatprep.subr.bf16.mxu0 0
    %788 = vmatpush1.bf16.msra.mxu0 %v763
    %789 = vmatprep.subr.bf16.mxu0 0
    %790 = vmatpush2.bf16.msra.mxu0 0
    %791 = vmatprep.subr.bf16.mxu0 0
    %792 = vmatpush2.bf16.msra.mxu0 0
    %793 = vmatprep.subr.bf16.mxu0 0
    %794 = vmatpush2.bf16.msra.mxu0 0
    %795 = vmatprep.subr.bf16.mxu0 0
    %796 = vmatpush2.bf16.msra.mxu0 0
    %797 = vmatprep.subr.bf16.mxu0 0
    %798 = vmatpush2.bf16.msra.mxu0 0
    %799 = vmatprep.subr.bf16.mxu0 0
    %800 = vmatpush2.bf16.msra.mxu0 0
    %801 = vmatprep.subr.bf16.mxu0 0
    %802 = vmatpush2.bf16.msra.mxu0 0
    %803 = vmatprep.subr.bf16.mxu0 0
    %804 = vmatpush2.bf16.msra.mxu0 0
    %805 = vmatprep.mubr.bf16.mxu0 0
    %806 = vmatmul.mubr.bf16.gmra.mxu0 %v768
    %v807 = vpop.f32.mrf.mxu0
    %v808 = vpop.f32.mrf.mxu0
    %v809 = vpop.f32.mrf.mxu0
    %v810 = vadd.f32 0.0, %v809
    %v811 = vpop.f32.mrf.mxu0
    %812 = vmatprep.mubr.bf16.mxu0 0
    %813 = vmatmul.mubr.bf16.gmra.mxu0 %v771
    %v814 = vpop.f32.mrf.mxu0
    %v815 = vpop.f32.mrf.mxu0
    %v816 = vpop.f32.mrf.mxu0
    %v817 = vadd.f32 0.0, %v816
    %v818 = vpop.f32.mrf.mxu0
    %819 = vdwg.mxu0
    %v821 = vlaneseq
    %v822 = vshrl.u32 %v821, 7
    %v823 = vsub.s32 0, %v822
    %v824 = vrot.slane %v736, %v823
    %v826 = vadd.f32 %v824, %v810
    %v827 = vadd.f32 %v824, %v817
    %v828 = vpack.c.bf16 %v733, %v732
    %v829 = vpack.c.bf16 %v735, %v734
    %s830 = scalar_lea.vmem [#allocation11], 16
    %v831 = vld [vmem:[%s830] sm:$0xf]
    %v832 = vld [vmem:[%s830 + $0x4] sm:$0xf]
    %v833 = vld [vmem:[%s830 + $0x8] sm:$0xf]
    %v834 = vld [vmem:[%s830 + $0xc] sm:$0xf]
    %v839 = vunpack.c.l.b16 %v831
    %v840 = vunpack.c.l.b16 %v832
    %v841 = vunpack.c.l.b16 %v833
    %v842 = vunpack.c.l.b16 %v834
    %v843 = vpack.c.b16 %v840, %v839
    %v844 = vpack.c.b16 %v842, %v841
    %v848 = vsel %vm373, %v828, 0
    %v851 = vsel %vm373, %v829, 0
    %853 = vmatprep.subr.bf16.mxu0 0
    %854 = vmatpush1.bf16.msra.mxu0 0
    %855 = vmatprep.subr.bf16.mxu0 0
    %856 = vmatpush1.bf16.msra.mxu0 0
    %857 = vmatprep.subr.bf16.mxu0 0
    %858 = vmatpush1.bf16.msra.mxu0 0
    %859 = vmatprep.subr.bf16.mxu0 0
    %860 = vmatpush1.bf16.msra.mxu0 0
    %861 = vmatprep.subr.bf16.mxu0 0
    %862 = vmatpush1.bf16.msra.mxu0 0
    %863 = vmatprep.subr.bf16.mxu0 0
    %864 = vmatpush1.bf16.msra.mxu0 0
    %865 = vmatprep.subr.bf16.mxu0 0
    %866 = vmatpush1.bf16.msra.mxu0 %v844
    %867 = vmatprep.subr.bf16.mxu0 0
    %868 = vmatpush1.bf16.msra.mxu0 %v843
    %869 = vmatprep.subr.bf16.mxu0 0
    %870 = vmatpush2.bf16.msra.mxu0 0
    %871 = vmatprep.subr.bf16.mxu0 0
    %872 = vmatpush2.bf16.msra.mxu0 0
    %873 = vmatprep.subr.bf16.mxu0 0
    %874 = vmatpush2.bf16.msra.mxu0 0
    %875 = vmatprep.subr.bf16.mxu0 0
    %876 = vmatpush2.bf16.msra.mxu0 0
    %877 = vmatprep.subr.bf16.mxu0 0
    %878 = vmatpush2.bf16.msra.mxu0 0
    %879 = vmatprep.subr.bf16.mxu0 0
    %880 = vmatpush2.bf16.msra.mxu0 0
    %881 = vmatprep.subr.bf16.mxu0 0
    %882 = vmatpush2.bf16.msra.mxu0 0
    %883 = vmatprep.subr.bf16.mxu0 0
    %884 = vmatpush2.bf16.msra.mxu0 0
    %885 = vmatprep.mubr.bf16.mxu0 0
    %886 = vmatmul.mubr.bf16.gmra.mxu0 %v848
    %v887 = vpop.f32.mrf.mxu0
    %v888 = vpop.f32.mrf.mxu0
    %v889 = vpop.f32.mrf.mxu0
    %v890 = vadd.f32 0.0, %v889
    %v891 = vpop.f32.mrf.mxu0
    %892 = vmatprep.mubr.bf16.mxu0 0
    %893 = vmatmul.mubr.bf16.gmra.mxu0 %v851
    %v894 = vpop.f32.mrf.mxu0
    %v895 = vpop.f32.mrf.mxu0
    %v896 = vpop.f32.mrf.mxu0
    %v897 = vadd.f32 0.0, %v896
    %v898 = vpop.f32.mrf.mxu0
    %899 = vdwg.mxu0
    %v900 = vadd.f32 %v826, %v890
    %v901 = vadd.f32 %v827, %v897
    %v902 = vmax.f32 %v900, 0.0
    %v903 = vmax.f32 %v901, 0.0
    %v904 = vadd.f32 %v902, %v542
    %v905 = vadd.f32 %v903, %v544
    %v906 = vmax.f32 %v904, 0.0
    %v907 = vmax.f32 %v905, 0.0
    %v908 = vpack.c.bf16 %v906, %v906
    %v909 = vpack.c.bf16 %v907, %v907
    %v910 = vld [vmem:[%s9] sm:$0xf]
    %v911 = vld [vmem:[%s9 + $0x4] sm:$0xf]
    %v912 = vld [vmem:[%s9 + $0x8] sm:$0xf]
    %v913 = vld [vmem:[%s9 + $0xc] sm:$0xf]
    %v914 = vld [vmem:[%s10] sm:$0x1]
    %v916 = vlaneseq
    %v917 = vshrl.u32 %v916, 7
    %v918 = vsub.s32 0, %v917
    %v919 = vrot.slane %v914, %v918
    %v923 = vunpack.c.l.b16 %v908
    %v924 = vunpack.c.l.b16 %v909
    %v925 = vrot.slane %v923, 7
    %v926 = vrot.slane %v924, 6
    %vm927 = vcmask 1041409
    %v928 = vsel %vm927, %v926, %v925
    %v929 = vpack.c.b16 %v928, %v928
    %v934 = vunpack.c.l.b16 %v910
    %v935 = vunpack.c.l.b16 %v911
    %v936 = vunpack.c.l.b16 %v912
    %v937 = vunpack.c.l.b16 %v913
    %v938 = vpack.c.b16 %v935, %v934
    %v939 = vpack.c.b16 %v937, %v936
    %v943 = vsel %vm373, %v929, 0
    %945 = vmatprep.subr.bf16.mxu0 0
    %946 = vmatpush1.bf16.msra.mxu0 0
    %947 = vmatprep.subr.bf16.mxu0 0
    %948 = vmatpush1.bf16.msra.mxu0 0
    %949 = vmatprep.subr.bf16.mxu0 0
    %950 = vmatpush1.bf16.msra.mxu0 0
    %951 = vmatprep.subr.bf16.mxu0 0
    %952 = vmatpush1.bf16.msra.mxu0 0
    %953 = vmatprep.subr.bf16.mxu0 0
    %954 = vmatpush1.bf16.msra.mxu0 0
    %955 = vmatprep.subr.bf16.mxu0 0
    %956 = vmatpush1.bf16.msra.mxu0 0
    %957 = vmatprep.subr.bf16.mxu0 0
    %958 = vmatpush1.bf16.msra.mxu0 %v939
    %959 = vmatprep.subr.bf16.mxu0 0
    %960 = vmatpush1.bf16.msra.mxu0 %v938
    %961 = vmatprep.subr.bf16.mxu0 0
    %962 = vmatpush2.bf16.msra.mxu0 0
    %963 = vmatprep.subr.bf16.mxu0 0
    %964 = vmatpush2.bf16.msra.mxu0 0
    %965 = vmatprep.subr.bf16.mxu0 0
    %966 = vmatpush2.bf16.msra.mxu0 0
    %967 = vmatprep.subr.bf16.mxu0 0
    %968 = vmatpush2.bf16.msra.mxu0 0
    %969 = vmatprep.subr.bf16.mxu0 0
    %970 = vmatpush2.bf16.msra.mxu0 0
    %971 = vmatprep.subr.bf16.mxu0 0
    %972 = vmatpush2.bf16.msra.mxu0 0
    %973 = vmatprep.subr.bf16.mxu0 0
    %974 = vmatpush2.bf16.msra.mxu0 0
    %975 = vmatprep.subr.bf16.mxu0 0
    %976 = vmatpush2.bf16.msra.mxu0 0
    %977 = vmatprep.mubr.bf16.mxu0 0
    %978 = vmatmul.mubr.bf16.gmra.mxu0 %v943
    %v979 = vpop.f32.mrf.mxu0
    %v980 = vadd.f32 %v919, %v979
    %v981 = vpop.f32.mrf.mxu0
    %v982 = vpop.f32.mrf.mxu0
    %v983 = vpop.f32.mrf.mxu0
    %984 = vdwg.mxu0
    %v985 = vsel %vm209, %v980, -inf
    %986 = vmax.xlane.f32.xlu0 %v985
    %v987 = vpop.xlane.xlu0 %986
    %v988 = vsub.f32 %v980, %v987
    %v989 = vmul.f32 %v988, 1.442695
    %v990 = vpow.pop %v989
    %v991 = vsel %vm209, %v990, 0.0
    %992 = vadd.xlane.f32.xlu0 %v991
    %v993 = vpop.xlane.xlu0 %992
    %v994 = vlog2.pop %v993
    %v995 = vmul.f32 %v994, 0.6931472
    %v996 = vsub.f32 %v988, %v995
    %997 = vst [vmem:[#allocation13] sm:$0x3] %v996
    // Predicated region
    $region70: #{tpu_custom_call.1} parent=1 // pred_check
      _
    $region71: #{tpu_custom_call.1} parent=1 // pred_check_branch
      %999 = sbr.rel (0) target = $region73
    $region72: #{tpu_custom_call.1} parent=1 // pred_region
      %s1001 = ssub.s32 32, 32
      %1002 = vsyncadd [#allocation4], %s1001
      %s1004 = sshll.u32 [#allocation13], 4
      %s1005 = int_to_ptr.vmem [resolvable:$true] %s1004
      %1007 = dma.vmem_to_hbm [thread:$0]  %s1005, 32, %s11, [#allocation4]
    $region73: #{tpu_custom_call.1} parent=1 // pred_fallthru
      _
    // Predicated region
    $region74: #{tpu_custom_call.1} parent=1 // pred_check
      _
    $region75: #{tpu_custom_call.1} parent=1 // pred_check_branch
      %1009 = sbr.rel (0) target = $region77
    $region76: #{tpu_custom_call.1} parent=1 // pred_region
      %1010 = dma.done [#allocation4], 32
    $region77: #{tpu_custom_call.1} parent=1 // pred_fallthru
      _
    %1011 = vsyncpa [#allocation3], 1
    %1012 = vsyncpa [#allocation6], 1
    %1013 = vsyncpa [#allocation9], 1
    %1014 = vsyncpa [#allocation12], 1
    %1015 = vsyncpa [#allocation4], 1

</llo_original>
